<compile_context>
chip_gen: v7x
topology: tpu7x:2x2x1
jax: 0.10.0
libtpu: 0.0.40
codegen_flags: <defaults>
</compile_context>

<pallas_src>
import jax
import jax.numpy as jnp
from jax import lax
from jax.experimental import pallas as pl
from jax.experimental.pallas import tpu as pltpu


def make_lstm_head_kernel(Bp, T, H):
    """Kernel closure over static sizes. Inputs (all f32):
         x2d   : (T*Bp, D)  time-major flattened input (batch zero-padded to Bp)
         wih_t : (D, 4H)    = weight_ih.T
         whh_t : (H, 4H)    = weight_hh.T
         b     : (1, 4H)    = b_ih + b_hh
         wfc   : (1, H)     fc weight row
         bfc   : (1, 1)     fc bias
       Output: (Bp, 1) sigmoid probabilities.
       Gate order matches PyTorch: [i, f, g, o]."""

    def kernel(x2d_ref, wih_t_ref, whh_t_ref, b_ref, wfc_ref, bfc_ref, out_ref):
        # One large input-projection matmul for all timesteps (off the serial
        # critical path), bias folded in once.
        xw = (jnp.dot(x2d_ref[...], wih_t_ref[...],
                      preferred_element_type=jnp.float32)
              + b_ref[...])                                      # (T*Bp, 4H)

        whh_t = whh_t_ref[...]                                   # (H, 4H)

        # Single-tanh gate activation: sigmoid lanes get pre-scaled by 0.5,
        # one tanh over the full (Bp, 4H) = (8, 128) vreg, then sigmoid lanes
        # recovered as 0.5*(t+1). Constants hoisted out of the unrolled loop.
        lane = lax.broadcasted_iota(jnp.int32, (Bp, 4 * H), 1)
        g_lanes = (lane >= 2 * H) & (lane < 3 * H)               # tanh ("g") lanes
        scale = jnp.where(g_lanes, 1.0, 0.5).astype(jnp.float32)
        shift = jnp.where(g_lanes, 0.0, 0.5).astype(jnp.float32)

        h = jnp.zeros((Bp, H), jnp.float32)
        c = jnp.zeros((Bp, H), jnp.float32)

        # T is small and static -> fully unrolled serial recurrence; with Bp=8
        # each xw slice is exactly one (8,128) tile (static, aligned, free).
        # TODO(synk): stage whh_t in the MXU across steps via
        # pltpu.matmul_push_rhs / matmul_acc_lhs / matmul_pop to drop the 7
        # redundant RHS pushes from the serial chain; jnp.dot kept for
        # robustness at this size.
        for t in range(T):
            g = xw[t * Bp:(t + 1) * Bp, :] + jnp.dot(
                h, whh_t, preferred_element_type=jnp.float32)    # (Bp, 4H)
            th = jnp.tanh(g * scale)                             # single EUP pass
            act = th * scale + shift                             # merge sigmoid/tanh
            i = act[:, 0:H]
            f = act[:, H:2 * H]
            gg = act[:, 2 * H:3 * H]
            o = act[:, 3 * H:4 * H]
            c = f * c + i * gg
            h = o * jnp.tanh(c)

        # Linear(H, 1): elementwise mul + lane reduce instead of an N=1 matmul.
        logits = jnp.sum(h * wfc_ref[...], axis=-1, keepdims=True) + bfc_ref[...]
        out_ref[...] = jax.nn.sigmoid(logits).astype(out_ref.dtype)

    return kernel


@jax.jit
def student_model_forward(x, w_ih, w_hh, b_ih, b_hh, w_fc, b_fc):
    B, T, D = x.shape
    H4, H = w_hh.shape

    # Pad batch up to a full sublane tile (8) so per-timestep gate slices are
    # (8,128)-aligned inside the kernel.
    Bp = max(8, ((B + 7) // 8) * 8)
    xp = jnp.zeros((Bp, T, D), jnp.float32).at[:B].set(x.astype(jnp.float32))

    # Layout prep lives under the same jit as the pallas_call: it fuses /
    # constant-folds instead of running as separate tiny XLA dispatches.
    x2d = jnp.swapaxes(xp, 0, 1).reshape(T * Bp, D)              # time-major
    wih_t = jnp.transpose(w_ih).astype(jnp.float32)              # (D, 4H)
    whh_t = jnp.transpose(w_hh).astype(jnp.float32)              # (H, 4H)
    b_sum = (b_ih + b_hh).reshape(1, H4).astype(jnp.float32)
    wfc = w_fc.reshape(1, H).astype(jnp.float32)
    bfc = b_fc.reshape(1, 1).astype(jnp.float32)

    vmem = pl.BlockSpec(memory_space=pltpu.MemorySpace.VMEM)
    out_p = pl.pallas_call(
        make_lstm_head_kernel(Bp, T, H),
        out_shape=jax.ShapeDtypeStruct((Bp, 1), jnp.float32),
        in_specs=[vmem] * 6,
        out_specs=vmem,
    )(x2d, wih_t, whh_t, b_sum, wfc, bfc)

    # Padded rows evaluate to sigmoid(b_fc) != 0 -> always slice back to true B.
    return out_p[:B]
    # TODO(synk): for large B/T add a batch-tiled grid with
    # dimension_semantics=("parallel", ...) so v7x's 2 TCs split the batch
    # (size VMEM against 64 MiB there, raise vmem_limit_bytes as needed), and
    # cast matmul operands to bf16 on v5e/v6e/v7x (relax tolerance to ~1e-2,
    # keep h/c state math in f32).


def student_model_ref(x, w_ih, w_hh, b_ih, b_hh, w_fc, b_fc):
    # Pure-JAX reference mirroring torch.nn.LSTM(batch_first) + Linear + Sigmoid.
    B, T, D = x.shape
    H = w_hh.shape[1]
    b = b_ih + b_hh

    def step(carry, x_t):
        h, c = carry
        g = x_t @ w_ih.T + h @ w_hh.T + b
        i = jax.nn.sigmoid(g[:, 0:H])
        f = jax.nn.sigmoid(g[:, H:2 * H])
        gg = jnp.tanh(g[:, 2 * H:3 * H])
        o = jax.nn.sigmoid(g[:, 3 * H:4 * H])
        c_new = f * c + i * gg
        h_new = o * jnp.tanh(c_new)
        return (h_new, c_new), None

    (h, _), _ = lax.scan(step, (jnp.zeros((B, H)), jnp.zeros((B, H))),
                         jnp.swapaxes(x, 0, 1))
    return jax.nn.sigmoid(h @ w_fc.T + b_fc)


if __name__ == "__main__":
    B, T, D, H = 4, 8, 16, 32     # batch, seq, input_size, hidden_size

    key = jax.random.PRNGKey(0)
    kx, k1, k2, k3, k4, k5, k6 = jax.random.split(key, 7)
    x = jax.random.normal(kx, (B, T, D), dtype=jnp.float32)

    # Deterministic "PyTorch-like" init: uniform(-1/sqrt(H), 1/sqrt(H)).
    s = 1.0 / jnp.sqrt(jnp.float32(H))
    w_ih = jax.random.uniform(k1, (4 * H, D), minval=-s, maxval=s, dtype=jnp.float32)
    w_hh = jax.random.uniform(k2, (4 * H, H), minval=-s, maxval=s, dtype=jnp.float32)
    b_ih = jax.random.uniform(k3, (4 * H,), minval=-s, maxval=s, dtype=jnp.float32)
    b_hh = jax.random.uniform(k4, (4 * H,), minval=-s, maxval=s, dtype=jnp.float32)
    w_fc = jax.random.uniform(k5, (1, H), minval=-s, maxval=s, dtype=jnp.float32)
    b_fc = jax.random.uniform(k6, (1,), minval=-s, maxval=s, dtype=jnp.float32)

    out = student_model_forward(x, w_ih, w_hh, b_ih, b_hh, w_fc, b_fc)
    out = jax.block_until_ready(out)

    ref = student_model_ref(x, w_ih, w_hh, b_ih, b_hh, w_fc, b_fc)
    assert out.shape == (B, 1)
    assert jnp.allclose(out, ref, atol=1e-4, rtol=1e-4), (out, ref)
    print("KERNEL_OK")
</pallas_src>

<mosaic_0001>
module attributes {stable_mosaic.version = 11 : i64} {
  func.func @kernel(%arg0: memref<64x16xf32, #tpu.memory_space<vmem>>, %arg1: memref<16x128xf32, #tpu.memory_space<vmem>>, %arg2: memref<32x128xf32, #tpu.memory_space<vmem>>, %arg3: memref<1x128xf32, #tpu.memory_space<vmem>>, %arg4: memref<1x32xf32, #tpu.memory_space<vmem>>, %arg5: memref<1x1xf32, #tpu.memory_space<vmem>>, %arg6: memref<8x1xf32, #tpu.memory_space<vmem>>) attributes {dimension_semantics = [], scalar_prefetch = 0 : i64, scratch_operands = 0 : i64, tpu.core_type = #tpu.core_type<tc>} {
    %c0 = arith.constant 0 : index
    %c0_0 = arith.constant 0 : index
    %0 = vector.load %arg0[%c0, %c0_0] : memref<64x16xf32, #tpu.memory_space<vmem>>, vector<64x16xf32>
    %c0_1 = arith.constant 0 : index
    %c0_2 = arith.constant 0 : index
    %1 = vector.load %arg1[%c0_1, %c0_2] : memref<16x128xf32, #tpu.memory_space<vmem>>, vector<16x128xf32>
    %cst = arith.constant dense<0.000000e+00> : vector<64x128xf32>
    %2 = tpu.matmul %0, %1, %cst {dimension_numbers = #tpu.dot_dimension_numbers<[1], [0], [0], [1], [0, 0, 1, 1], [], []>} : vector<64x16xf32>, vector<16x128xf32>, vector<64x128xf32> -> vector<64x128xf32>
    %c0_3 = arith.constant 0 : index
    %c0_4 = arith.constant 0 : index
    %3 = vector.load %arg3[%c0_3, %c0_4] : memref<1x128xf32, #tpu.memory_space<vmem>>, vector<1x128xf32>
    %4 = vector.broadcast %3 : vector<1x128xf32> to vector<64x128xf32>
    %5 = arith.addf %2, %4 : vector<64x128xf32>
    %c0_5 = arith.constant 0 : index
    %c0_6 = arith.constant 0 : index
    %6 = vector.load %arg2[%c0_5, %c0_6] : memref<32x128xf32, #tpu.memory_space<vmem>>, vector<32x128xf32>
    %7 = tpu.iota {dimensions = array<i32: 1>} : vector<8x128xi32>
    %c64_i32 = arith.constant 64 : i32
    %8 = vector.broadcast %c64_i32 : i32 to vector<8x128xi32>
    %9 = arith.cmpi sge, %7, %8 : vector<8x128xi32>
    %c96_i32 = arith.constant 96 : i32
    %10 = vector.broadcast %c96_i32 : i32 to vector<8x128xi32>
    %11 = arith.cmpi slt, %7, %10 : vector<8x128xi32>
    %12 = arith.andi %9, %11 : vector<8x128xi1>
    %cst_7 = arith.constant 1.000000e+00 : f32
    %cst_8 = arith.constant 5.000000e-01 : f32
    %13 = vector.broadcast %cst_7 : f32 to vector<8x128xf32>
    %14 = vector.broadcast %cst_8 : f32 to vector<8x128xf32>
    %15 = arith.select %12, %13, %14 : vector<8x128xi1>, vector<8x128xf32>
    %cst_9 = arith.constant 0.000000e+00 : f32
    %cst_10 = arith.constant 5.000000e-01 : f32
    %16 = vector.broadcast %cst_9 : f32 to vector<8x128xf32>
    %17 = vector.broadcast %cst_10 : f32 to vector<8x128xf32>
    %18 = arith.select %12, %16, %17 : vector<8x128xi1>, vector<8x128xf32>
    %cst_11 = arith.constant 0.000000e+00 : f32
    %19 = vector.broadcast %cst_11 : f32 to vector<8x32xf32>
    %cst_12 = arith.constant 0.000000e+00 : f32
    %20 = vector.broadcast %cst_12 : f32 to vector<8x32xf32>
    %21 = vector.extract_strided_slice %5 {offsets = [0, 0], sizes = [8, 128], strides = [1, 1]} : vector<64x128xf32> to vector<8x128xf32>
    %cst_13 = arith.constant dense<0.000000e+00> : vector<8x128xf32>
    %22 = tpu.matmul %19, %6, %cst_13 {dimension_numbers = #tpu.dot_dimension_numbers<[1], [0], [0], [1], [0, 0, 1, 1], [], []>} : vector<8x32xf32>, vector<32x128xf32>, vector<8x128xf32> -> vector<8x128xf32>
    %23 = arith.addf %21, %22 : vector<8x128xf32>
    %24 = arith.mulf %23, %15 : vector<8x128xf32>
    %25 = math.tanh %24 : vector<8x128xf32>
    %26 = arith.mulf %25, %15 : vector<8x128xf32>
    %27 = arith.addf %26, %18 : vector<8x128xf32>
    %28 = vector.extract_strided_slice %27 {offsets = [0, 0], sizes = [8, 32], strides = [1, 1]} : vector<8x128xf32> to vector<8x32xf32>
    %29 = vector.extract_strided_slice %27 {offsets = [0, 32], sizes = [8, 32], strides = [1, 1]} : vector<8x128xf32> to vector<8x32xf32>
    %30 = vector.extract_strided_slice %27 {offsets = [0, 64], sizes = [8, 32], strides = [1, 1]} : vector<8x128xf32> to vector<8x32xf32>
    %31 = vector.extract_strided_slice %27 {offsets = [0, 96], sizes = [8, 32], strides = [1, 1]} : vector<8x128xf32> to vector<8x32xf32>
    %32 = arith.mulf %29, %20 : vector<8x32xf32>
    %33 = arith.mulf %28, %30 : vector<8x32xf32>
    %34 = arith.addf %32, %33 : vector<8x32xf32>
    %35 = math.tanh %34 : vector<8x32xf32>
    %36 = arith.mulf %31, %35 : vector<8x32xf32>
    %37 = vector.extract_strided_slice %5 {offsets = [8, 0], sizes = [8, 128], strides = [1, 1]} : vector<64x128xf32> to vector<8x128xf32>
    %cst_14 = arith.constant dense<0.000000e+00> : vector<8x128xf32>
    %38 = tpu.matmul %36, %6, %cst_14 {dimension_numbers = #tpu.dot_dimension_numbers<[1], [0], [0], [1], [0, 0, 1, 1], [], []>} : vector<8x32xf32>, vector<32x128xf32>, vector<8x128xf32> -> vector<8x128xf32>
    %39 = arith.addf %37, %38 : vector<8x128xf32>
    %40 = arith.mulf %39, %15 : vector<8x128xf32>
    %41 = math.tanh %40 : vector<8x128xf32>
    %42 = arith.mulf %41, %15 : vector<8x128xf32>
    %43 = arith.addf %42, %18 : vector<8x128xf32>
    %44 = vector.extract_strided_slice %43 {offsets = [0, 0], sizes = [8, 32], strides = [1, 1]} : vector<8x128xf32> to vector<8x32xf32>
    %45 = vector.extract_strided_slice %43 {offsets = [0, 32], sizes = [8, 32], strides = [1, 1]} : vector<8x128xf32> to vector<8x32xf32>
    %46 = vector.extract_strided_slice %43 {offsets = [0, 64], sizes = [8, 32], strides = [1, 1]} : vector<8x128xf32> to vector<8x32xf32>
    %47 = vector.extract_strided_slice %43 {offsets = [0, 96], sizes = [8, 32], strides = [1, 1]} : vector<8x128xf32> to vector<8x32xf32>
    %48 = arith.mulf %45, %34 : vector<8x32xf32>
    %49 = arith.mulf %44, %46 : vector<8x32xf32>
    %50 = arith.addf %48, %49 : vector<8x32xf32>
    %51 = math.tanh %50 : vector<8x32xf32>
    %52 = arith.mulf %47, %51 : vector<8x32xf32>
    %53 = vector.extract_strided_slice %5 {offsets = [16, 0], sizes = [8, 128], strides = [1, 1]} : vector<64x128xf32> to vector<8x128xf32>
    %cst_15 = arith.constant dense<0.000000e+00> : vector<8x128xf32>
    %54 = tpu.matmul %52, %6, %cst_15 {dimension_numbers = #tpu.dot_dimension_numbers<[1], [0], [0], [1], [0, 0, 1, 1], [], []>} : vector<8x32xf32>, vector<32x128xf32>, vector<8x128xf32> -> vector<8x128xf32>
    %55 = arith.addf %53, %54 : vector<8x128xf32>
    %56 = arith.mulf %55, %15 : vector<8x128xf32>
    %57 = math.tanh %56 : vector<8x128xf32>
    %58 = arith.mulf %57, %15 : vector<8x128xf32>
    %59 = arith.addf %58, %18 : vector<8x128xf32>
    %60 = vector.extract_strided_slice %59 {offsets = [0, 0], sizes = [8, 32], strides = [1, 1]} : vector<8x128xf32> to vector<8x32xf32>
    %61 = vector.extract_strided_slice %59 {offsets = [0, 32], sizes = [8, 32], strides = [1, 1]} : vector<8x128xf32> to vector<8x32xf32>
    %62 = vector.extract_strided_slice %59 {offsets = [0, 64], sizes = [8, 32], strides = [1, 1]} : vector<8x128xf32> to vector<8x32xf32>
    %63 = vector.extract_strided_slice %59 {offsets = [0, 96], sizes = [8, 32], strides = [1, 1]} : vector<8x128xf32> to vector<8x32xf32>
    %64 = arith.mulf %61, %50 : vector<8x32xf32>
    %65 = arith.mulf %60, %62 : vector<8x32xf32>
    %66 = arith.addf %64, %65 : vector<8x32xf32>
    %67 = math.tanh %66 : vector<8x32xf32>
    %68 = arith.mulf %63, %67 : vector<8x32xf32>
    %69 = vector.extract_strided_slice %5 {offsets = [24, 0], sizes = [8, 128], strides = [1, 1]} : vector<64x128xf32> to vector<8x128xf32>
    %cst_16 = arith.constant dense<0.000000e+00> : vector<8x128xf32>
    %70 = tpu.matmul %68, %6, %cst_16 {dimension_numbers = #tpu.dot_dimension_numbers<[1], [0], [0], [1], [0, 0, 1, 1], [], []>} : vector<8x32xf32>, vector<32x128xf32>, vector<8x128xf32> -> vector<8x128xf32>
    %71 = arith.addf %69, %70 : vector<8x128xf32>
    %72 = arith.mulf %71, %15 : vector<8x128xf32>
    %73 = math.tanh %72 : vector<8x128xf32>
    %74 = arith.mulf %73, %15 : vector<8x128xf32>
    %75 = arith.addf %74, %18 : vector<8x128xf32>
    %76 = vector.extract_strided_slice %75 {offsets = [0, 0], sizes = [8, 32], strides = [1, 1]} : vector<8x128xf32> to vector<8x32xf32>
    %77 = vector.extract_strided_slice %75 {offsets = [0, 32], sizes = [8, 32], strides = [1, 1]} : vector<8x128xf32> to vector<8x32xf32>
    %78 = vector.extract_strided_slice %75 {offsets = [0, 64], sizes = [8, 32], strides = [1, 1]} : vector<8x128xf32> to vector<8x32xf32>
    %79 = vector.extract_strided_slice %75 {offsets = [0, 96], sizes = [8, 32], strides = [1, 1]} : vector<8x128xf32> to vector<8x32xf32>
    %80 = arith.mulf %77, %66 : vector<8x32xf32>
    %81 = arith.mulf %76, %78 : vector<8x32xf32>
    %82 = arith.addf %80, %81 : vector<8x32xf32>
    %83 = math.tanh %82 : vector<8x32xf32>
    %84 = arith.mulf %79, %83 : vector<8x32xf32>
    %85 = vector.extract_strided_slice %5 {offsets = [32, 0], sizes = [8, 128], strides = [1, 1]} : vector<64x128xf32> to vector<8x128xf32>
    %cst_17 = arith.constant dense<0.000000e+00> : vector<8x128xf32>
    %86 = tpu.matmul %84, %6, %cst_17 {dimension_numbers = #tpu.dot_dimension_numbers<[1], [0], [0], [1], [0, 0, 1, 1], [], []>} : vector<8x32xf32>, vector<32x128xf32>, vector<8x128xf32> -> vector<8x128xf32>
    %87 = arith.addf %85, %86 : vector<8x128xf32>
    %88 = arith.mulf %87, %15 : vector<8x128xf32>
    %89 = math.tanh %88 : vector<8x128xf32>
    %90 = arith.mulf %89, %15 : vector<8x128xf32>
    %91 = arith.addf %90, %18 : vector<8x128xf32>
    %92 = vector.extract_strided_slice %91 {offsets = [0, 0], sizes = [8, 32], strides = [1, 1]} : vector<8x128xf32> to vector<8x32xf32>
    %93 = vector.extract_strided_slice %91 {offsets = [0, 32], sizes = [8, 32], strides = [1, 1]} : vector<8x128xf32> to vector<8x32xf32>
    %94 = vector.extract_strided_slice %91 {offsets = [0, 64], sizes = [8, 32], strides = [1, 1]} : vector<8x128xf32> to vector<8x32xf32>
    %95 = vector.extract_strided_slice %91 {offsets = [0, 96], sizes = [8, 32], strides = [1, 1]} : vector<8x128xf32> to vector<8x32xf32>
    %96 = arith.mulf %93, %82 : vector<8x32xf32>
    %97 = arith.mulf %92, %94 : vector<8x32xf32>
    %98 = arith.addf %96, %97 : vector<8x32xf32>
    %99 = math.tanh %98 : vector<8x32xf32>
    %100 = arith.mulf %95, %99 : vector<8x32xf32>
    %101 = vector.extract_strided_slice %5 {offsets = [40, 0], sizes = [8, 128], strides = [1, 1]} : vector<64x128xf32> to vector<8x128xf32>
    %cst_18 = arith.constant dense<0.000000e+00> : vector<8x128xf32>
    %102 = tpu.matmul %100, %6, %cst_18 {dimension_numbers = #tpu.dot_dimension_numbers<[1], [0], [0], [1], [0, 0, 1, 1], [], []>} : vector<8x32xf32>, vector<32x128xf32>, vector<8x128xf32> -> vector<8x128xf32>
    %103 = arith.addf %101, %102 : vector<8x128xf32>
    %104 = arith.mulf %103, %15 : vector<8x128xf32>
    %105 = math.tanh %104 : vector<8x128xf32>
    %106 = arith.mulf %105, %15 : vector<8x128xf32>
    %107 = arith.addf %106, %18 : vector<8x128xf32>
    %108 = vector.extract_strided_slice %107 {offsets = [0, 0], sizes = [8, 32], strides = [1, 1]} : vector<8x128xf32> to vector<8x32xf32>
    %109 = vector.extract_strided_slice %107 {offsets = [0, 32], sizes = [8, 32], strides = [1, 1]} : vector<8x128xf32> to vector<8x32xf32>
    %110 = vector.extract_strided_slice %107 {offsets = [0, 64], sizes = [8, 32], strides = [1, 1]} : vector<8x128xf32> to vector<8x32xf32>
    %111 = vector.extract_strided_slice %107 {offsets = [0, 96], sizes = [8, 32], strides = [1, 1]} : vector<8x128xf32> to vector<8x32xf32>
    %112 = arith.mulf %109, %98 : vector<8x32xf32>
    %113 = arith.mulf %108, %110 : vector<8x32xf32>
    %114 = arith.addf %112, %113 : vector<8x32xf32>
    %115 = math.tanh %114 : vector<8x32xf32>
    %116 = arith.mulf %111, %115 : vector<8x32xf32>
    %117 = vector.extract_strided_slice %5 {offsets = [48, 0], sizes = [8, 128], strides = [1, 1]} : vector<64x128xf32> to vector<8x128xf32>
    %cst_19 = arith.constant dense<0.000000e+00> : vector<8x128xf32>
    %118 = tpu.matmul %116, %6, %cst_19 {dimension_numbers = #tpu.dot_dimension_numbers<[1], [0], [0], [1], [0, 0, 1, 1], [], []>} : vector<8x32xf32>, vector<32x128xf32>, vector<8x128xf32> -> vector<8x128xf32>
    %119 = arith.addf %117, %118 : vector<8x128xf32>
    %120 = arith.mulf %119, %15 : vector<8x128xf32>
    %121 = math.tanh %120 : vector<8x128xf32>
    %122 = arith.mulf %121, %15 : vector<8x128xf32>
    %123 = arith.addf %122, %18 : vector<8x128xf32>
    %124 = vector.extract_strided_slice %123 {offsets = [0, 0], sizes = [8, 32], strides = [1, 1]} : vector<8x128xf32> to vector<8x32xf32>
    %125 = vector.extract_strided_slice %123 {offsets = [0, 32], sizes = [8, 32], strides = [1, 1]} : vector<8x128xf32> to vector<8x32xf32>
    %126 = vector.extract_strided_slice %123 {offsets = [0, 64], sizes = [8, 32], strides = [1, 1]} : vector<8x128xf32> to vector<8x32xf32>
    %127 = vector.extract_strided_slice %123 {offsets = [0, 96], sizes = [8, 32], strides = [1, 1]} : vector<8x128xf32> to vector<8x32xf32>
    %128 = arith.mulf %125, %114 : vector<8x32xf32>
    %129 = arith.mulf %124, %126 : vector<8x32xf32>
    %130 = arith.addf %128, %129 : vector<8x32xf32>
    %131 = math.tanh %130 : vector<8x32xf32>
    %132 = arith.mulf %127, %131 : vector<8x32xf32>
    %133 = vector.extract_strided_slice %5 {offsets = [56, 0], sizes = [8, 128], strides = [1, 1]} : vector<64x128xf32> to vector<8x128xf32>
    %cst_20 = arith.constant dense<0.000000e+00> : vector<8x128xf32>
    %134 = tpu.matmul %132, %6, %cst_20 {dimension_numbers = #tpu.dot_dimension_numbers<[1], [0], [0], [1], [0, 0, 1, 1], [], []>} : vector<8x32xf32>, vector<32x128xf32>, vector<8x128xf32> -> vector<8x128xf32>
    %135 = arith.addf %133, %134 : vector<8x128xf32>
    %136 = arith.mulf %135, %15 : vector<8x128xf32>
    %137 = math.tanh %136 : vector<8x128xf32>
    %138 = arith.mulf %137, %15 : vector<8x128xf32>
    %139 = arith.addf %138, %18 : vector<8x128xf32>
    %140 = vector.extract_strided_slice %139 {offsets = [0, 0], sizes = [8, 32], strides = [1, 1]} : vector<8x128xf32> to vector<8x32xf32>
    %141 = vector.extract_strided_slice %139 {offsets = [0, 32], sizes = [8, 32], strides = [1, 1]} : vector<8x128xf32> to vector<8x32xf32>
    %142 = vector.extract_strided_slice %139 {offsets = [0, 64], sizes = [8, 32], strides = [1, 1]} : vector<8x128xf32> to vector<8x32xf32>
    %143 = vector.extract_strided_slice %139 {offsets = [0, 96], sizes = [8, 32], strides = [1, 1]} : vector<8x128xf32> to vector<8x32xf32>
    %144 = arith.mulf %141, %130 : vector<8x32xf32>
    %145 = arith.mulf %140, %142 : vector<8x32xf32>
    %146 = arith.addf %144, %145 : vector<8x32xf32>
    %147 = math.tanh %146 : vector<8x32xf32>
    %148 = arith.mulf %143, %147 : vector<8x32xf32>
    %c0_21 = arith.constant 0 : index
    %c0_22 = arith.constant 0 : index
    %149 = vector.load %arg4[%c0_21, %c0_22] : memref<1x32xf32, #tpu.memory_space<vmem>>, vector<1x32xf32>
    %150 = vector.broadcast %149 : vector<1x32xf32> to vector<8x32xf32>
    %151 = arith.mulf %148, %150 : vector<8x32xf32>
    %cst_23 = arith.constant dense<0.000000e+00> : vector<8xf32>
    %152 = vector.multi_reduction <add>, %151, %cst_23 [1] : vector<8x32xf32> to vector<8xf32>
    %153 = vector.shape_cast %152 : vector<8xf32> to vector<8x1xf32>
    %c0_24 = arith.constant 0 : index
    %c0_25 = arith.constant 0 : index
    %154 = vector.load %arg5[%c0_24, %c0_25] : memref<1x1xf32, #tpu.memory_space<vmem>>, vector<1x1xf32>
    %155 = vector.broadcast %154 : vector<1x1xf32> to vector<8x1xf32>
    %156 = arith.addf %153, %155 : vector<8x1xf32>
    %157 = arith.negf %156 : vector<8x1xf32>
    %158 = math.exp %157 : vector<8x1xf32>
    %cst_26 = arith.constant 1.000000e+00 : f32
    %159 = vector.broadcast %cst_26 : f32 to vector<8x1xf32>
    %160 = arith.addf %159, %158 : vector<8x1xf32>
    %161 = arith.divf %159, %160 : vector<8x1xf32>
    %c0_27 = arith.constant 0 : index
    %c0_28 = arith.constant 0 : index
    %162 = vector.load %arg6[%c0_27, %c0_28] : memref<8x1xf32, #tpu.memory_space<vmem>>, vector<8x1xf32>
    tpu.vector_store %arg6[%c0_27, %c0_28], %161 {strides = array<i32>} : memref<8x1xf32, #tpu.memory_space<vmem>>, vector<8x1xf32>,
    return
  }
}

</mosaic_0001>

<llo_original>
// kernel: student_model_forward.1
$region0: #{student_model_forward.1}
  #allocation0 [shape = 'u32[]', space=smem, size = 0x4, offset = 0x4, fixed_abs, tag = 'smem constant byte address 0x4 - core index']
  #allocation1 [shape = 'u32[144,128]{1,0:T(1,128)}', space=vmem, size = 0x12000, scoped, tag = 'internal scratch']
  #allocation2 [shape = 'f32[1,1]{1,0:T(1,128)S(1)}', space=vmem, size = 0x200, scoped, tag = 'scoped memory for student_model_forward.1']
  %s0 = inlined_call_operand.vmem [shape: f32[64,16], index: 0, kind: input, shape index: {}]
  %s1 = inlined_call_operand.vmem [shape: f32[16,128], index: 1, kind: input, shape index: {}]
  %s2 = inlined_call_operand.vmem [shape: f32[32,128], index: 2, kind: input, shape index: {}]
  %s3 = inlined_call_operand.vmem [shape: f32[1,128], index: 3, kind: input, shape index: {}]
  %s4 = inlined_call_operand.vmem [shape: f32[1,32], index: 4, kind: input, shape index: {}]
  %s5 = inlined_call_operand.<no memory space> [shape: f32[1,1], index: 5, kind: input, shape index: {}]
  %s6 = inlined_call_operand.vmem [shape: f32[8,1], index: 6, kind: output, shape index: {}]
  %s7 = sld [smem:[#allocation0]]
  $region34: #{student_model_forward.1} parent=0
    _
  %s9 = ssub.s32 1, %s7
  %s10 = scalar_select 0, %s9, %s7
  %v11 = vstv %s5
  %12 = vst [vmem:[#allocation2] sm:$0x1] %v11
  // Predicated region
  $region2: #{student_model_forward.1} parent=0 // pred_check
    _
  $region3: #{student_model_forward.1} parent=0 // pred_check_branch
    %14 = sbr.rel (0) target = $region5
  $region4: #{student_model_forward.1} parent=0 // pred_region
    _
  $region5: #{student_model_forward.1} parent=0 // pred_fallthru
    _
  // Predicated region
  $region6: #{student_model_forward.1} parent=0 // pred_check
    _
  $region7: #{student_model_forward.1} parent=0 // pred_check_branch
    %16 = sbr.rel (0) target = $region9
  $region8: #{student_model_forward.1} parent=0 // pred_region
    _
  $region9: #{student_model_forward.1} parent=0 // pred_fallthru
    _
  // Predicated region
  $region10: #{student_model_forward.1} parent=0 // pred_check
    _
  $region11: #{student_model_forward.1} parent=0 // pred_check_branch
    %18 = sbr.rel (0) target = $region13
  $region12: #{student_model_forward.1} parent=0 // pred_region
    _
  $region13: #{student_model_forward.1} parent=0 // pred_fallthru
    _
  // Predicated region
  $region14: #{student_model_forward.1} parent=0 // pred_check
    _
  $region15: #{student_model_forward.1} parent=0 // pred_check_branch
    %20 = sbr.rel (0) target = $region17
  $region16: #{student_model_forward.1} parent=0 // pred_region
    _
  $region17: #{student_model_forward.1} parent=0 // pred_fallthru
    _
  // Predicated region
  $region18: #{student_model_forward.1} parent=0 // pred_check
    _
  $region19: #{student_model_forward.1} parent=0 // pred_check_branch
    %22 = sbr.rel (0) target = $region21
  $region20: #{student_model_forward.1} parent=0 // pred_region
    _
  $region21: #{student_model_forward.1} parent=0 // pred_fallthru
    _
  // Predicated region
  $region22: #{student_model_forward.1} parent=0 // pred_check
    _
  $region23: #{student_model_forward.1} parent=0 // pred_check_branch
    %24 = sbr.rel (0) target = $region25
  $region24: #{student_model_forward.1} parent=0 // pred_region
    _
  $region25: #{student_model_forward.1} parent=0 // pred_fallthru
    _
  %v25 = vld [vmem:[%s0] sm:$0xff]
  %v26 = vld [vmem:[%s0 + $0x8] sm:$0xff]
  %v27 = vld [vmem:[%s0 + $0x10] sm:$0xff]
  %v28 = vld [vmem:[%s0 + $0x18] sm:$0xff]
  %v29 = vld [vmem:[%s0 + $0x20] sm:$0xff]
  %v30 = vld [vmem:[%s0 + $0x28] sm:$0xff]
  %v31 = vld [vmem:[%s0 + $0x30] sm:$0xff]
  %v32 = vld [vmem:[%s0 + $0x38] sm:$0xff]
  %v33 = vld [vmem:[%s1] sm:$0xff]
  %v34 = vld [vmem:[%s1 + $0x8] sm:$0xff]
  %v35 = vld [vmem:[%s3] sm:$0x1]
  %v37 = vlaneseq
  %v38 = vshrl.u32 %v37, 7
  %v39 = vsub.s32 0, %v38
  %v40 = vrot.slane %v35, %v39
  %vm42 = vcmask 130048
  %v44 = vsel %vm42, %v25, 0
  %v47 = vsel %vm42, %v26, 0
  %v50 = vsel %vm42, %v27, 0
  %v53 = vsel %vm42, %v28, 0
  %v56 = vsel %vm42, %v29, 0
  %v59 = vsel %vm42, %v30, 0
  %v62 = vsel %vm42, %v31, 0
  %v65 = vsel %vm42, %v32, 0
  %67 = vmatprep.subr.mxu0 0.0
  %68 = vmatpush1.msra.mxu0 %v33
  %69 = vmatprep.subr.mxu0 0.0
  %70 = vmatpush1.msra.mxu0 %v34
  %71 = vmatprep.subr.mxu0 0.0
  %72 = vmatpush1.msra.mxu0 0.0
  %73 = vmatprep.subr.mxu0 0.0
  %74 = vmatpush1.msra.mxu0 0.0
  %75 = vmatprep.subr.mxu0 0.0
  %76 = vmatpush1.msra.mxu0 0.0
  %77 = vmatprep.subr.mxu0 0.0
  %78 = vmatpush1.msra.mxu0 0.0
  %79 = vmatprep.subr.mxu0 0.0
  %80 = vmatpush1.msra.mxu0 0.0
  %81 = vmatprep.subr.mxu0 0.0
  %82 = vmatpush1.msra.mxu0 0.0
  %83 = vmatprep.subr.mxu0 0.0
  %84 = vmatpush1.msra.mxu0 0.0
  %85 = vmatprep.subr.mxu0 0.0
  %86 = vmatpush1.msra.mxu0 0.0
  %87 = vmatprep.subr.mxu0 0.0
  %88 = vmatpush1.msra.mxu0 0.0
  %89 = vmatprep.subr.mxu0 0.0
  %90 = vmatpush1.msra.mxu0 0.0
  %91 = vmatprep.subr.mxu0 0.0
  %92 = vmatpush1.msra.mxu0 0.0
  %93 = vmatprep.subr.mxu0 0.0
  %94 = vmatpush1.msra.mxu0 0.0
  %95 = vmatprep.subr.mxu0 0.0
  %96 = vmatpush1.msra.mxu0 0.0
  %97 = vmatprep.subr.mxu0 0.0
  %98 = vmatpush1.msra.mxu0 0.0
  %99 = vmatprep.subr.mxu0 0.0
  %100 = vmatpush1.msra.mxu0 0.0
  %101 = vmatprep.subr.mxu0 0.0
  %102 = vmatpush1.msra.mxu0 0.0
  %103 = vmatprep.subr.mxu0 0.0
  %104 = vmatpush1.msra.mxu0 0.0
  %105 = vmatprep.subr.mxu0 0.0
  %106 = vmatpush1.msra.mxu0 0.0
  %107 = vmatprep.subr.mxu0 0.0
  %108 = vmatpush1.msra.mxu0 0.0
  %109 = vmatprep.subr.mxu0 0.0
  %110 = vmatpush1.msra.mxu0 0.0
  %111 = vmatprep.subr.mxu0 0.0
  %112 = vmatpush1.msra.mxu0 0.0
  %113 = vmatprep.subr.mxu0 0.0
  %114 = vmatpush1.msra.mxu0 0.0
  %115 = vmatprep.subr.mxu0 0.0
  %116 = vmatpush1.msra.mxu0 0.0
  %117 = vmatprep.subr.mxu0 0.0
  %118 = vmatpush1.msra.mxu0 0.0
  %119 = vmatprep.subr.mxu0 0.0
  %120 = vmatpush1.msra.mxu0 0.0
  %121 = vmatprep.subr.mxu0 0.0
  %122 = vmatpush1.msra.mxu0 0.0
  %123 = vmatprep.subr.mxu0 0.0
  %124 = vmatpush1.msra.mxu0 0.0
  %125 = vmatprep.subr.mxu0 0.0
  %126 = vmatpush1.msra.mxu0 0.0
  %127 = vmatprep.subr.mxu0 0.0
  %128 = vmatpush1.msra.mxu0 0.0
  %129 = vmatprep.subr.mxu0 0.0
  %130 = vmatpush1.msra.mxu0 0.0
  %131 = vmatprep.mubr.f32.mxu0 0.0
  %132 = vmatmul.mubr.f32.gmra.mrb[0].mxu0 %v44
  %v133 = vpop.f32.mrb[0].mxu0
  %v134 = vadd.f32 %v40, %v133
  %v135 = vpop.f32.mrb[0].mxu0
  %136 = vmatprep.mubr.f32.mxu0 0.0
  %137 = vmatmul.mubr.f32.gmra.mrb[0].mxu0 %v47
  %v138 = vpop.f32.mrb[0].mxu0
  %v139 = vadd.f32 %v40, %v138
  %v140 = vpop.f32.mrb[0].mxu0
  %141 = vmatprep.mubr.f32.mxu0 0.0
  %142 = vmatmul.mubr.f32.gmra.mrb[0].mxu0 %v50
  %v143 = vpop.f32.mrb[0].mxu0
  %v144 = vadd.f32 %v40, %v143
  %v145 = vpop.f32.mrb[0].mxu0
  %146 = vmatprep.mubr.f32.mxu0 0.0
  %147 = vmatmul.mubr.f32.gmra.mrb[0].mxu0 %v53
  %v148 = vpop.f32.mrb[0].mxu0
  %v149 = vadd.f32 %v40, %v148
  %v150 = vpop.f32.mrb[0].mxu0
  %151 = vmatprep.mubr.f32.mxu0 0.0
  %152 = vmatmul.mubr.f32.gmra.mrb[0].mxu0 %v56
  %v153 = vpop.f32.mrb[0].mxu0
  %v154 = vadd.f32 %v40, %v153
  %v155 = vpop.f32.mrb[0].mxu0
  %156 = vmatprep.mubr.f32.mxu0 0.0
  %157 = vmatmul.mubr.f32.gmra.mrb[0].mxu0 %v59
  %v158 = vpop.f32.mrb[0].mxu0
  %v159 = vadd.f32 %v40, %v158
  %v160 = vpop.f32.mrb[0].mxu0
  %161 = vmatprep.mubr.f32.mxu0 0.0
  %162 = vmatmul.mubr.f32.gmra.mrb[0].mxu0 %v62
  %v163 = vpop.f32.mrb[0].mxu0
  %v164 = vadd.f32 %v40, %v163
  %v165 = vpop.f32.mrb[0].mxu0
  %166 = vmatprep.mubr.f32.mxu0 0.0
  %167 = vmatmul.mubr.f32.gmra.mrb[0].mxu0 %v65
  %v168 = vpop.f32.mrb[0].mxu0
  %v169 = vadd.f32 %v40, %v168
  %v170 = vpop.f32.mrb[0].mxu0
  %171 = vdwg.mxu0
  %v172 = vld [vmem:[%s2] sm:$0xff]
  %v173 = vld [vmem:[%s2 + $0x8] sm:$0xff]
  %v174 = vld [vmem:[%s2 + $0x10] sm:$0xff]
  %v175 = vld [vmem:[%s2 + $0x18] sm:$0xff]
  %v176 = vlaneseq
  %v177 = vand.u32 %v176, 127
  %vm178 = vcmp.ge.s32.totalorder %v177, 64
  %vm179 = vcmp.lt.s32.totalorder %v177, 96
  %vm180 = vmand %vm178, %vm179
  %v181 = vsel %vm180, 1.0, 0.5
  %v182 = vsel %vm180, 0.0, 0.5
  %vm183 = vcmask 261120
  %v185 = vsel %vm183, 0.0, 0
  %187 = vmatprep.subr.mxu0 0.0
  %188 = vmatpush1.msra.mxu0 %v172
  %189 = vmatprep.subr.mxu0 0.0
  %190 = vmatpush1.msra.mxu0 %v173
  %191 = vmatprep.subr.mxu0 0.0
  %192 = vmatpush1.msra.mxu0 %v174
  %193 = vmatprep.subr.mxu0 0.0
  %194 = vmatpush1.msra.mxu0 %v175
  %195 = vmatprep.subr.mxu0 0.0
  %196 = vmatpush1.msra.mxu0 0.0
  %197 = vmatprep.subr.mxu0 0.0
  %198 = vmatpush1.msra.mxu0 0.0
  %199 = vmatprep.subr.mxu0 0.0
  %200 = vmatpush1.msra.mxu0 0.0
  %201 = vmatprep.subr.mxu0 0.0
  %202 = vmatpush1.msra.mxu0 0.0
  %203 = vmatprep.subr.mxu0 0.0
  %204 = vmatpush1.msra.mxu0 0.0
  %205 = vmatprep.subr.mxu0 0.0
  %206 = vmatpush1.msra.mxu0 0.0
  %207 = vmatprep.subr.mxu0 0.0
  %208 = vmatpush1.msra.mxu0 0.0
  %209 = vmatprep.subr.mxu0 0.0
  %210 = vmatpush1.msra.mxu0 0.0
  %211 = vmatprep.subr.mxu0 0.0
  %212 = vmatpush1.msra.mxu0 0.0
  %213 = vmatprep.subr.mxu0 0.0
  %214 = vmatpush1.msra.mxu0 0.0
  %215 = vmatprep.subr.mxu0 0.0
  %216 = vmatpush1.msra.mxu0 0.0
  %217 = vmatprep.subr.mxu0 0.0
  %218 = vmatpush1.msra.mxu0 0.0
  %219 = vmatprep.subr.mxu0 0.0
  %220 = vmatpush1.msra.mxu0 0.0
  %221 = vmatprep.subr.mxu0 0.0
  %222 = vmatpush1.msra.mxu0 0.0
  %223 = vmatprep.subr.mxu0 0.0
  %224 = vmatpush1.msra.mxu0 0.0
  %225 = vmatprep.subr.mxu0 0.0
  %226 = vmatpush1.msra.mxu0 0.0
  %227 = vmatprep.subr.mxu0 0.0
  %228 = vmatpush1.msra.mxu0 0.0
  %229 = vmatprep.subr.mxu0 0.0
  %230 = vmatpush1.msra.mxu0 0.0
  %231 = vmatprep.subr.mxu0 0.0
  %232 = vmatpush1.msra.mxu0 0.0
  %233 = vmatprep.subr.mxu0 0.0
  %234 = vmatpush1.msra.mxu0 0.0
  %235 = vmatprep.subr.mxu0 0.0
  %236 = vmatpush1.msra.mxu0 0.0
  %237 = vmatprep.subr.mxu0 0.0
  %238 = vmatpush1.msra.mxu0 0.0
  %239 = vmatprep.subr.mxu0 0.0
  %240 = vmatpush1.msra.mxu0 0.0
  %241 = vmatprep.subr.mxu0 0.0
  %242 = vmatpush1.msra.mxu0 0.0
  %243 = vmatprep.subr.mxu0 0.0
  %244 = vmatpush1.msra.mxu0 0.0
  %245 = vmatprep.subr.mxu0 0.0
  %246 = vmatpush1.msra.mxu0 0.0
  %247 = vmatprep.subr.mxu0 0.0
  %248 = vmatpush1.msra.mxu0 0.0
  %249 = vmatprep.subr.mxu0 0.0
  %250 = vmatpush1.msra.mxu0 0.0
  %251 = vmatprep.mubr.f32.mxu0 0.0
  %252 = vmatmul.mubr.f32.gmra.mrb[0].mxu0 %v185
  %v253 = vpop.f32.mrb[0].mxu0
  %v254 = vadd.f32 0.0, %v253
  %v255 = vpop.f32.mrb[0].mxu0
  %256 = vdwg.mxu0
  %v257 = vadd.f32 %v134, %v254
  %v258 = vmul.f32 %v257, %v181
  %v259 = vtanh.pop %v258
  %v260 = vmul.f32 %v259, %v181
  %v261 = vadd.f32 %v260, %v182
  %v262 = vmul.f32 %v261, 0.0
  %264 = vrot.lane.b32.xlu0 %v261, 64
  %v265 = vpop.permute.xlu0 %264
  %v267 = vmul.f32 %v261, %v265
  %269 = vrot.lane.b32.xlu0 %v267, 32
  %v270 = vpop.permute.xlu0 %269
  %v272 = vadd.f32 %v262, %v270
  %v273 = vtanh.pop %v272
  %275 = vrot.lane.b32.xlu0 %v273, 64
  %v276 = vpop.permute.xlu0 %275
  %v278 = vmul.f32 %v261, %v276
  %280 = vrot.lane.b32.xlu0 %v278, 32
  %v281 = vpop.permute.xlu0 %280
  %v282 = vsel %vm183, %v281, 0
  %284 = vmatprep.subr.mxu0 0.0
  %285 = vmatpush1.msra.mxu0 %v172
  %286 = vmatprep.subr.mxu0 0.0
  %287 = vmatpush1.msra.mxu0 %v173
  %288 = vmatprep.subr.mxu0 0.0
  %289 = vmatpush1.msra.mxu0 %v174
  %290 = vmatprep.subr.mxu0 0.0
  %291 = vmatpush1.msra.mxu0 %v175
  %292 = vmatprep.subr.mxu0 0.0
  %293 = vmatpush1.msra.mxu0 0.0
  %294 = vmatprep.subr.mxu0 0.0
  %295 = vmatpush1.msra.mxu0 0.0
  %296 = vmatprep.subr.mxu0 0.0
  %297 = vmatpush1.msra.mxu0 0.0
  %298 = vmatprep.subr.mxu0 0.0
  %299 = vmatpush1.msra.mxu0 0.0
  %300 = vmatprep.subr.mxu0 0.0
  %301 = vmatpush1.msra.mxu0 0.0
  %302 = vmatprep.subr.mxu0 0.0
  %303 = vmatpush1.msra.mxu0 0.0
  %304 = vmatprep.subr.mxu0 0.0
  %305 = vmatpush1.msra.mxu0 0.0
  %306 = vmatprep.subr.mxu0 0.0
  %307 = vmatpush1.msra.mxu0 0.0
  %308 = vmatprep.subr.mxu0 0.0
  %309 = vmatpush1.msra.mxu0 0.0
  %310 = vmatprep.subr.mxu0 0.0
  %311 = vmatpush1.msra.mxu0 0.0
  %312 = vmatprep.subr.mxu0 0.0
  %313 = vmatpush1.msra.mxu0 0.0
  %314 = vmatprep.subr.mxu0 0.0
  %315 = vmatpush1.msra.mxu0 0.0
  %316 = vmatprep.subr.mxu0 0.0
  %317 = vmatpush1.msra.mxu0 0.0
  %318 = vmatprep.subr.mxu0 0.0
  %319 = vmatpush1.msra.mxu0 0.0
  %320 = vmatprep.subr.mxu0 0.0
  %321 = vmatpush1.msra.mxu0 0.0
  %322 = vmatprep.subr.mxu0 0.0
  %323 = vmatpush1.msra.mxu0 0.0
  %324 = vmatprep.subr.mxu0 0.0
  %325 = vmatpush1.msra.mxu0 0.0
  %326 = vmatprep.subr.mxu0 0.0
  %327 = vmatpush1.msra.mxu0 0.0
  %328 = vmatprep.subr.mxu0 0.0
  %329 = vmatpush1.msra.mxu0 0.0
  %330 = vmatprep.subr.mxu0 0.0
  %331 = vmatpush1.msra.mxu0 0.0
  %332 = vmatprep.subr.mxu0 0.0
  %333 = vmatpush1.msra.mxu0 0.0
  %334 = vmatprep.subr.mxu0 0.0
  %335 = vmatpush1.msra.mxu0 0.0
  %336 = vmatprep.subr.mxu0 0.0
  %337 = vmatpush1.msra.mxu0 0.0
  %338 = vmatprep.subr.mxu0 0.0
  %339 = vmatpush1.msra.mxu0 0.0
  %340 = vmatprep.subr.mxu0 0.0
  %341 = vmatpush1.msra.mxu0 0.0
  %342 = vmatprep.subr.mxu0 0.0
  %343 = vmatpush1.msra.mxu0 0.0
  %344 = vmatprep.subr.mxu0 0.0
  %345 = vmatpush1.msra.mxu0 0.0
  %346 = vmatprep.subr.mxu0 0.0
  %347 = vmatpush1.msra.mxu0 0.0
  %348 = vmatprep.mubr.f32.mxu0 0.0
  %349 = vmatmul.mubr.f32.gmra.mrb[0].mxu0 %v282
  %v350 = vpop.f32.mrb[0].mxu0
  %v351 = vadd.f32 0.0, %v350
  %v352 = vpop.f32.mrb[0].mxu0
  %353 = vdwg.mxu0
  %v354 = vadd.f32 %v139, %v351
  %v355 = vmul.f32 %v354, %v181
  %v356 = vtanh.pop %v355
  %v357 = vmul.f32 %v356, %v181
  %v358 = vadd.f32 %v357, %v182
  %v359 = vmul.f32 %v358, %v272
  %361 = vrot.lane.b32.xlu0 %v358, 64
  %v362 = vpop.permute.xlu0 %361
  %v364 = vmul.f32 %v358, %v362
  %366 = vrot.lane.b32.xlu0 %v364, 32
  %v367 = vpop.permute.xlu0 %366
  %v369 = vadd.f32 %v359, %v367
  %v370 = vtanh.pop %v369
  %372 = vrot.lane.b32.xlu0 %v370, 64
  %v373 = vpop.permute.xlu0 %372
  %v375 = vmul.f32 %v358, %v373
  %377 = vrot.lane.b32.xlu0 %v375, 32
  %v378 = vpop.permute.xlu0 %377
  %v379 = vsel %vm183, %v378, 0
  %381 = vmatprep.subr.mxu0 0.0
  %382 = vmatpush1.msra.mxu0 %v172
  %383 = vmatprep.subr.mxu0 0.0
  %384 = vmatpush1.msra.mxu0 %v173
  %385 = vmatprep.subr.mxu0 0.0
  %386 = vmatpush1.msra.mxu0 %v174
  %387 = vmatprep.subr.mxu0 0.0
  %388 = vmatpush1.msra.mxu0 %v175
  %389 = vmatprep.subr.mxu0 0.0
  %390 = vmatpush1.msra.mxu0 0.0
  %391 = vmatprep.subr.mxu0 0.0
  %392 = vmatpush1.msra.mxu0 0.0
  %393 = vmatprep.subr.mxu0 0.0
  %394 = vmatpush1.msra.mxu0 0.0
  %395 = vmatprep.subr.mxu0 0.0
  %396 = vmatpush1.msra.mxu0 0.0
  %397 = vmatprep.subr.mxu0 0.0
  %398 = vmatpush1.msra.mxu0 0.0
  %399 = vmatprep.subr.mxu0 0.0
  %400 = vmatpush1.msra.mxu0 0.0
  %401 = vmatprep.subr.mxu0 0.0
  %402 = vmatpush1.msra.mxu0 0.0
  %403 = vmatprep.subr.mxu0 0.0
  %404 = vmatpush1.msra.mxu0 0.0
  %405 = vmatprep.subr.mxu0 0.0
  %406 = vmatpush1.msra.mxu0 0.0
  %407 = vmatprep.subr.mxu0 0.0
  %408 = vmatpush1.msra.mxu0 0.0
  %409 = vmatprep.subr.mxu0 0.0
  %410 = vmatpush1.msra.mxu0 0.0
  %411 = vmatprep.subr.mxu0 0.0
  %412 = vmatpush1.msra.mxu0 0.0
  %413 = vmatprep.subr.mxu0 0.0
  %414 = vmatpush1.msra.mxu0 0.0
  %415 = vmatprep.subr.mxu0 0.0
  %416 = vmatpush1.msra.mxu0 0.0
  %417 = vmatprep.subr.mxu0 0.0
  %418 = vmatpush1.msra.mxu0 0.0
  %419 = vmatprep.subr.mxu0 0.0
  %420 = vmatpush1.msra.mxu0 0.0
  %421 = vmatprep.subr.mxu0 0.0
  %422 = vmatpush1.msra.mxu0 0.0
  %423 = vmatprep.subr.mxu0 0.0
  %424 = vmatpush1.msra.mxu0 0.0
  %425 = vmatprep.subr.mxu0 0.0
  %426 = vmatpush1.msra.mxu0 0.0
  %427 = vmatprep.subr.mxu0 0.0
  %428 = vmatpush1.msra.mxu0 0.0
  %429 = vmatprep.subr.mxu0 0.0
  %430 = vmatpush1.msra.mxu0 0.0
  %431 = vmatprep.subr.mxu0 0.0
  %432 = vmatpush1.msra.mxu0 0.0
  %433 = vmatprep.subr.mxu0 0.0
  %434 = vmatpush1.msra.mxu0 0.0
  %435 = vmatprep.subr.mxu0 0.0
  %436 = vmatpush1.msra.mxu0 0.0
  %437 = vmatprep.subr.mxu0 0.0
  %438 = vmatpush1.msra.mxu0 0.0
  %439 = vmatprep.subr.mxu0 0.0
  %440 = vmatpush1.msra.mxu0 0.0
  %441 = vmatprep.subr.mxu0 0.0
  %442 = vmatpush1.msra.mxu0 0.0
  %443 = vmatprep.subr.mxu0 0.0
  %444 = vmatpush1.msra.mxu0 0.0
  %445 = vmatprep.mubr.f32.mxu0 0.0
  %446 = vmatmul.mubr.f32.gmra.mrb[0].mxu0 %v379
  %v447 = vpop.f32.mrb[0].mxu0
  %v448 = vadd.f32 0.0, %v447
  %v449 = vpop.f32.mrb[0].mxu0
  %450 = vdwg.mxu0
  %v451 = vadd.f32 %v144, %v448
  %v452 = vmul.f32 %v451, %v181
  %v453 = vtanh.pop %v452
  %v454 = vmul.f32 %v453, %v181
  %v455 = vadd.f32 %v454, %v182
  %v456 = vmul.f32 %v455, %v369
  %458 = vrot.lane.b32.xlu0 %v455, 64
  %v459 = vpop.permute.xlu0 %458
  %v461 = vmul.f32 %v455, %v459
  %463 = vrot.lane.b32.xlu0 %v461, 32
  %v464 = vpop.permute.xlu0 %463
  %v466 = vadd.f32 %v456, %v464
  %v467 = vtanh.pop %v466
  %469 = vrot.lane.b32.xlu0 %v467, 64
  %v470 = vpop.permute.xlu0 %469
  %v472 = vmul.f32 %v455, %v470
  %474 = vrot.lane.b32.xlu0 %v472, 32
  %v475 = vpop.permute.xlu0 %474
  %v476 = vsel %vm183, %v475, 0
  %478 = vmatprep.subr.mxu0 0.0
  %479 = vmatpush1.msra.mxu0 %v172
  %480 = vmatprep.subr.mxu0 0.0
  %481 = vmatpush1.msra.mxu0 %v173
  %482 = vmatprep.subr.mxu0 0.0
  %483 = vmatpush1.msra.mxu0 %v174
  %484 = vmatprep.subr.mxu0 0.0
  %485 = vmatpush1.msra.mxu0 %v175
  %486 = vmatprep.subr.mxu0 0.0
  %487 = vmatpush1.msra.mxu0 0.0
  %488 = vmatprep.subr.mxu0 0.0
  %489 = vmatpush1.msra.mxu0 0.0
  %490 = vmatprep.subr.mxu0 0.0
  %491 = vmatpush1.msra.mxu0 0.0
  %492 = vmatprep.subr.mxu0 0.0
  %493 = vmatpush1.msra.mxu0 0.0
  %494 = vmatprep.subr.mxu0 0.0
  %495 = vmatpush1.msra.mxu0 0.0
  %496 = vmatprep.subr.mxu0 0.0
  %497 = vmatpush1.msra.mxu0 0.0
  %498 = vmatprep.subr.mxu0 0.0
  %499 = vmatpush1.msra.mxu0 0.0
  %500 = vmatprep.subr.mxu0 0.0
  %501 = vmatpush1.msra.mxu0 0.0
  %502 = vmatprep.subr.mxu0 0.0
  %503 = vmatpush1.msra.mxu0 0.0
  %504 = vmatprep.subr.mxu0 0.0
  %505 = vmatpush1.msra.mxu0 0.0
  %506 = vmatprep.subr.mxu0 0.0
  %507 = vmatpush1.msra.mxu0 0.0
  %508 = vmatprep.subr.mxu0 0.0
  %509 = vmatpush1.msra.mxu0 0.0
  %510 = vmatprep.subr.mxu0 0.0
  %511 = vmatpush1.msra.mxu0 0.0
  %512 = vmatprep.subr.mxu0 0.0
  %513 = vmatpush1.msra.mxu0 0.0
  %514 = vmatprep.subr.mxu0 0.0
  %515 = vmatpush1.msra.mxu0 0.0
  %516 = vmatprep.subr.mxu0 0.0
  %517 = vmatpush1.msra.mxu0 0.0
  %518 = vmatprep.subr.mxu0 0.0
  %519 = vmatpush1.msra.mxu0 0.0
  %520 = vmatprep.subr.mxu0 0.0
  %521 = vmatpush1.msra.mxu0 0.0
  %522 = vmatprep.subr.mxu0 0.0
  %523 = vmatpush1.msra.mxu0 0.0
  %524 = vmatprep.subr.mxu0 0.0
  %525 = vmatpush1.msra.mxu0 0.0
  %526 = vmatprep.subr.mxu0 0.0
  %527 = vmatpush1.msra.mxu0 0.0
  %528 = vmatprep.subr.mxu0 0.0
  %529 = vmatpush1.msra.mxu0 0.0
  %530 = vmatprep.subr.mxu0 0.0
  %531 = vmatpush1.msra.mxu0 0.0
  %532 = vmatprep.subr.mxu0 0.0
  %533 = vmatpush1.msra.mxu0 0.0
  %534 = vmatprep.subr.mxu0 0.0
  %535 = vmatpush1.msra.mxu0 0.0
  %536 = vmatprep.subr.mxu0 0.0
  %537 = vmatpush1.msra.mxu0 0.0
  %538 = vmatprep.subr.mxu0 0.0
  %539 = vmatpush1.msra.mxu0 0.0
  %540 = vmatprep.subr.mxu0 0.0
  %541 = vmatpush1.msra.mxu0 0.0
  %542 = vmatprep.mubr.f32.mxu0 0.0
  %543 = vmatmul.mubr.f32.gmra.mrb[0].mxu0 %v476
  %v544 = vpop.f32.mrb[0].mxu0
  %v545 = vadd.f32 0.0, %v544
  %v546 = vpop.f32.mrb[0].mxu0
  %547 = vdwg.mxu0
  %v548 = vadd.f32 %v149, %v545
  %v549 = vmul.f32 %v548, %v181
  %v550 = vtanh.pop %v549
  %v551 = vmul.f32 %v550, %v181
  %v552 = vadd.f32 %v551, %v182
  %v553 = vmul.f32 %v552, %v466
  %555 = vrot.lane.b32.xlu0 %v552, 64
  %v556 = vpop.permute.xlu0 %555
  %v558 = vmul.f32 %v552, %v556
  %560 = vrot.lane.b32.xlu0 %v558, 32
  %v561 = vpop.permute.xlu0 %560
  %v563 = vadd.f32 %v553, %v561
  %v564 = vtanh.pop %v563
  %566 = vrot.lane.b32.xlu0 %v564, 64
  %v567 = vpop.permute.xlu0 %566
  %v569 = vmul.f32 %v552, %v567
  %571 = vrot.lane.b32.xlu0 %v569, 32
  %v572 = vpop.permute.xlu0 %571
  %v573 = vsel %vm183, %v572, 0
  %575 = vmatprep.subr.mxu0 0.0
  %576 = vmatpush1.msra.mxu0 %v172
  %577 = vmatprep.subr.mxu0 0.0
  %578 = vmatpush1.msra.mxu0 %v173
  %579 = vmatprep.subr.mxu0 0.0
  %580 = vmatpush1.msra.mxu0 %v174
  %581 = vmatprep.subr.mxu0 0.0
  %582 = vmatpush1.msra.mxu0 %v175
  %583 = vmatprep.subr.mxu0 0.0
  %584 = vmatpush1.msra.mxu0 0.0
  %585 = vmatprep.subr.mxu0 0.0
  %586 = vmatpush1.msra.mxu0 0.0
  %587 = vmatprep.subr.mxu0 0.0
  %588 = vmatpush1.msra.mxu0 0.0
  %589 = vmatprep.subr.mxu0 0.0
  %590 = vmatpush1.msra.mxu0 0.0
  %591 = vmatprep.subr.mxu0 0.0
  %592 = vmatpush1.msra.mxu0 0.0
  %593 = vmatprep.subr.mxu0 0.0
  %594 = vmatpush1.msra.mxu0 0.0
  %595 = vmatprep.subr.mxu0 0.0
  %596 = vmatpush1.msra.mxu0 0.0
  %597 = vmatprep.subr.mxu0 0.0
  %598 = vmatpush1.msra.mxu0 0.0
  %599 = vmatprep.subr.mxu0 0.0
  %600 = vmatpush1.msra.mxu0 0.0
  %601 = vmatprep.subr.mxu0 0.0
  %602 = vmatpush1.msra.mxu0 0.0
  %603 = vmatprep.subr.mxu0 0.0
  %604 = vmatpush1.msra.mxu0 0.0
  %605 = vmatprep.subr.mxu0 0.0
  %606 = vmatpush1.msra.mxu0 0.0
  %607 = vmatprep.subr.mxu0 0.0
  %608 = vmatpush1.msra.mxu0 0.0
  %609 = vmatprep.subr.mxu0 0.0
  %610 = vmatpush1.msra.mxu0 0.0
  %611 = vmatprep.subr.mxu0 0.0
  %612 = vmatpush1.msra.mxu0 0.0
  %613 = vmatprep.subr.mxu0 0.0
  %614 = vmatpush1.msra.mxu0 0.0
  %615 = vmatprep.subr.mxu0 0.0
  %616 = vmatpush1.msra.mxu0 0.0
  %617 = vmatprep.subr.mxu0 0.0
  %618 = vmatpush1.msra.mxu0 0.0
  %619 = vmatprep.subr.mxu0 0.0
  %620 = vmatpush1.msra.mxu0 0.0
  %621 = vmatprep.subr.mxu0 0.0
  %622 = vmatpush1.msra.mxu0 0.0
  %623 = vmatprep.subr.mxu0 0.0
  %624 = vmatpush1.msra.mxu0 0.0
  %625 = vmatprep.subr.mxu0 0.0
  %626 = vmatpush1.msra.mxu0 0.0
  %627 = vmatprep.subr.mxu0 0.0
  %628 = vmatpush1.msra.mxu0 0.0
  %629 = vmatprep.subr.mxu0 0.0
  %630 = vmatpush1.msra.mxu0 0.0
  %631 = vmatprep.subr.mxu0 0.0
  %632 = vmatpush1.msra.mxu0 0.0
  %633 = vmatprep.subr.mxu0 0.0
  %634 = vmatpush1.msra.mxu0 0.0
  %635 = vmatprep.subr.mxu0 0.0
  %636 = vmatpush1.msra.mxu0 0.0
  %637 = vmatprep.subr.mxu0 0.0
  %638 = vmatpush1.msra.mxu0 0.0
  %639 = vmatprep.mubr.f32.mxu0 0.0
  %640 = vmatmul.mubr.f32.gmra.mrb[0].mxu0 %v573
  %v641 = vpop.f32.mrb[0].mxu0
  %v642 = vadd.f32 0.0, %v641
  %v643 = vpop.f32.mrb[0].mxu0
  %644 = vdwg.mxu0
  %v645 = vadd.f32 %v154, %v642
  %v646 = vmul.f32 %v645, %v181
  %v647 = vtanh.pop %v646
  %v648 = vmul.f32 %v647, %v181
  %v649 = vadd.f32 %v648, %v182
  %v650 = vmul.f32 %v649, %v563
  %652 = vrot.lane.b32.xlu0 %v649, 64
  %v653 = vpop.permute.xlu0 %652
  %v655 = vmul.f32 %v649, %v653
  %657 = vrot.lane.b32.xlu0 %v655, 32
  %v658 = vpop.permute.xlu0 %657
  %v660 = vadd.f32 %v650, %v658
  %v661 = vtanh.pop %v660
  %663 = vrot.lane.b32.xlu0 %v661, 64
  %v664 = vpop.permute.xlu0 %663
  %v666 = vmul.f32 %v649, %v664
  %668 = vrot.lane.b32.xlu0 %v666, 32
  %v669 = vpop.permute.xlu0 %668
  %v670 = vsel %vm183, %v669, 0
  %672 = vmatprep.subr.mxu0 0.0
  %673 = vmatpush1.msra.mxu0 %v172
  %674 = vmatprep.subr.mxu0 0.0
  %675 = vmatpush1.msra.mxu0 %v173
  %676 = vmatprep.subr.mxu0 0.0
  %677 = vmatpush1.msra.mxu0 %v174
  %678 = vmatprep.subr.mxu0 0.0
  %679 = vmatpush1.msra.mxu0 %v175
  %680 = vmatprep.subr.mxu0 0.0
  %681 = vmatpush1.msra.mxu0 0.0
  %682 = vmatprep.subr.mxu0 0.0
  %683 = vmatpush1.msra.mxu0 0.0
  %684 = vmatprep.subr.mxu0 0.0
  %685 = vmatpush1.msra.mxu0 0.0
  %686 = vmatprep.subr.mxu0 0.0
  %687 = vmatpush1.msra.mxu0 0.0
  %688 = vmatprep.subr.mxu0 0.0
  %689 = vmatpush1.msra.mxu0 0.0
  %690 = vmatprep.subr.mxu0 0.0
  %691 = vmatpush1.msra.mxu0 0.0
  %692 = vmatprep.subr.mxu0 0.0
  %693 = vmatpush1.msra.mxu0 0.0
  %694 = vmatprep.subr.mxu0 0.0
  %695 = vmatpush1.msra.mxu0 0.0
  %696 = vmatprep.subr.mxu0 0.0
  %697 = vmatpush1.msra.mxu0 0.0
  %698 = vmatprep.subr.mxu0 0.0
  %699 = vmatpush1.msra.mxu0 0.0
  %700 = vmatprep.subr.mxu0 0.0
  %701 = vmatpush1.msra.mxu0 0.0
  %702 = vmatprep.subr.mxu0 0.0
  %703 = vmatpush1.msra.mxu0 0.0
  %704 = vmatprep.subr.mxu0 0.0
  %705 = vmatpush1.msra.mxu0 0.0
  %706 = vmatprep.subr.mxu0 0.0
  %707 = vmatpush1.msra.mxu0 0.0
  %708 = vmatprep.subr.mxu0 0.0
  %709 = vmatpush1.msra.mxu0 0.0
  %710 = vmatprep.subr.mxu0 0.0
  %711 = vmatpush1.msra.mxu0 0.0
  %712 = vmatprep.subr.mxu0 0.0
  %713 = vmatpush1.msra.mxu0 0.0
  %714 = vmatprep.subr.mxu0 0.0
  %715 = vmatpush1.msra.mxu0 0.0
  %716 = vmatprep.subr.mxu0 0.0
  %717 = vmatpush1.msra.mxu0 0.0
  %718 = vmatprep.subr.mxu0 0.0
  %719 = vmatpush1.msra.mxu0 0.0
  %720 = vmatprep.subr.mxu0 0.0
  %721 = vmatpush1.msra.mxu0 0.0
  %722 = vmatprep.subr.mxu0 0.0
  %723 = vmatpush1.msra.mxu0 0.0
  %724 = vmatprep.subr.mxu0 0.0
  %725 = vmatpush1.msra.mxu0 0.0
  %726 = vmatprep.subr.mxu0 0.0
  %727 = vmatpush1.msra.mxu0 0.0
  %728 = vmatprep.subr.mxu0 0.0
  %729 = vmatpush1.msra.mxu0 0.0
  %730 = vmatprep.subr.mxu0 0.0
  %731 = vmatpush1.msra.mxu0 0.0
  %732 = vmatprep.subr.mxu0 0.0
  %733 = vmatpush1.msra.mxu0 0.0
  %734 = vmatprep.subr.mxu0 0.0
  %735 = vmatpush1.msra.mxu0 0.0
  %736 = vmatprep.mubr.f32.mxu0 0.0
  %737 = vmatmul.mubr.f32.gmra.mrb[0].mxu0 %v670
  %v738 = vpop.f32.mrb[0].mxu0
  %v739 = vadd.f32 0.0, %v738
  %v740 = vpop.f32.mrb[0].mxu0
  %741 = vdwg.mxu0
  %v742 = vadd.f32 %v159, %v739
  %v743 = vmul.f32 %v742, %v181
  %v744 = vtanh.pop %v743
  %v745 = vmul.f32 %v744, %v181
  %v746 = vadd.f32 %v745, %v182
  %v747 = vmul.f32 %v746, %v660
  %749 = vrot.lane.b32.xlu0 %v746, 64
  %v750 = vpop.permute.xlu0 %749
  %v752 = vmul.f32 %v746, %v750
  %754 = vrot.lane.b32.xlu0 %v752, 32
  %v755 = vpop.permute.xlu0 %754
  %v757 = vadd.f32 %v747, %v755
  %v758 = vtanh.pop %v757
  %760 = vrot.lane.b32.xlu0 %v758, 64
  %v761 = vpop.permute.xlu0 %760
  %v763 = vmul.f32 %v746, %v761
  %765 = vrot.lane.b32.xlu0 %v763, 32
  %v766 = vpop.permute.xlu0 %765
  %v767 = vsel %vm183, %v766, 0
  %769 = vmatprep.subr.mxu0 0.0
  %770 = vmatpush1.msra.mxu0 %v172
  %771 = vmatprep.subr.mxu0 0.0
  %772 = vmatpush1.msra.mxu0 %v173
  %773 = vmatprep.subr.mxu0 0.0
  %774 = vmatpush1.msra.mxu0 %v174
  %775 = vmatprep.subr.mxu0 0.0
  %776 = vmatpush1.msra.mxu0 %v175
  %777 = vmatprep.subr.mxu0 0.0
  %778 = vmatpush1.msra.mxu0 0.0
  %779 = vmatprep.subr.mxu0 0.0
  %780 = vmatpush1.msra.mxu0 0.0
  %781 = vmatprep.subr.mxu0 0.0
  %782 = vmatpush1.msra.mxu0 0.0
  %783 = vmatprep.subr.mxu0 0.0
  %784 = vmatpush1.msra.mxu0 0.0
  %785 = vmatprep.subr.mxu0 0.0
  %786 = vmatpush1.msra.mxu0 0.0
  %787 = vmatprep.subr.mxu0 0.0
  %788 = vmatpush1.msra.mxu0 0.0
  %789 = vmatprep.subr.mxu0 0.0
  %790 = vmatpush1.msra.mxu0 0.0
  %791 = vmatprep.subr.mxu0 0.0
  %792 = vmatpush1.msra.mxu0 0.0
  %793 = vmatprep.subr.mxu0 0.0
  %794 = vmatpush1.msra.mxu0 0.0
  %795 = vmatprep.subr.mxu0 0.0
  %796 = vmatpush1.msra.mxu0 0.0
  %797 = vmatprep.subr.mxu0 0.0
  %798 = vmatpush1.msra.mxu0 0.0
  %799 = vmatprep.subr.mxu0 0.0
  %800 = vmatpush1.msra.mxu0 0.0
  %801 = vmatprep.subr.mxu0 0.0
  %802 = vmatpush1.msra.mxu0 0.0
  %803 = vmatprep.subr.mxu0 0.0
  %804 = vmatpush1.msra.mxu0 0.0
  %805 = vmatprep.subr.mxu0 0.0
  %806 = vmatpush1.msra.mxu0 0.0
  %807 = vmatprep.subr.mxu0 0.0
  %808 = vmatpush1.msra.mxu0 0.0
  %809 = vmatprep.subr.mxu0 0.0
  %810 = vmatpush1.msra.mxu0 0.0
  %811 = vmatprep.subr.mxu0 0.0
  %812 = vmatpush1.msra.mxu0 0.0
  %813 = vmatprep.subr.mxu0 0.0
  %814 = vmatpush1.msra.mxu0 0.0
  %815 = vmatprep.subr.mxu0 0.0
  %816 = vmatpush1.msra.mxu0 0.0
  %817 = vmatprep.subr.mxu0 0.0
  %818 = vmatpush1.msra.mxu0 0.0
  %819 = vmatprep.subr.mxu0 0.0
  %820 = vmatpush1.msra.mxu0 0.0
  %821 = vmatprep.subr.mxu0 0.0
  %822 = vmatpush1.msra.mxu0 0.0
  %823 = vmatprep.subr.mxu0 0.0
  %824 = vmatpush1.msra.mxu0 0.0
  %825 = vmatprep.subr.mxu0 0.0
  %826 = vmatpush1.msra.mxu0 0.0
  %827 = vmatprep.subr.mxu0 0.0
  %828 = vmatpush1.msra.mxu0 0.0
  %829 = vmatprep.subr.mxu0 0.0
  %830 = vmatpush1.msra.mxu0 0.0
  %831 = vmatprep.subr.mxu0 0.0
  %832 = vmatpush1.msra.mxu0 0.0
  %833 = vmatprep.mubr.f32.mxu0 0.0
  %834 = vmatmul.mubr.f32.gmra.mrb[0].mxu0 %v767
  %v835 = vpop.f32.mrb[0].mxu0
  %v836 = vadd.f32 0.0, %v835
  %v837 = vpop.f32.mrb[0].mxu0
  %838 = vdwg.mxu0
  %v839 = vadd.f32 %v164, %v836
  %v840 = vmul.f32 %v839, %v181
  %v841 = vtanh.pop %v840
  %v842 = vmul.f32 %v841, %v181
  %v843 = vadd.f32 %v842, %v182
  %v844 = vmul.f32 %v843, %v757
  %846 = vrot.lane.b32.xlu0 %v843, 64
  %v847 = vpop.permute.xlu0 %846
  %v849 = vmul.f32 %v843, %v847
  %851 = vrot.lane.b32.xlu0 %v849, 32
  %v852 = vpop.permute.xlu0 %851
  %v854 = vadd.f32 %v844, %v852
  %v855 = vtanh.pop %v854
  %857 = vrot.lane.b32.xlu0 %v855, 64
  %v858 = vpop.permute.xlu0 %857
  %v860 = vmul.f32 %v843, %v858
  %862 = vrot.lane.b32.xlu0 %v860, 32
  %v863 = vpop.permute.xlu0 %862
  %v864 = vsel %vm183, %v863, 0
  %866 = vmatprep.subr.mxu0 0.0
  %867 = vmatpush1.msra.mxu0 %v172
  %868 = vmatprep.subr.mxu0 0.0
  %869 = vmatpush1.msra.mxu0 %v173
  %870 = vmatprep.subr.mxu0 0.0
  %871 = vmatpush1.msra.mxu0 %v174
  %872 = vmatprep.subr.mxu0 0.0
  %873 = vmatpush1.msra.mxu0 %v175
  %874 = vmatprep.subr.mxu0 0.0
  %875 = vmatpush1.msra.mxu0 0.0
  %876 = vmatprep.subr.mxu0 0.0
  %877 = vmatpush1.msra.mxu0 0.0
  %878 = vmatprep.subr.mxu0 0.0
  %879 = vmatpush1.msra.mxu0 0.0
  %880 = vmatprep.subr.mxu0 0.0
  %881 = vmatpush1.msra.mxu0 0.0
  %882 = vmatprep.subr.mxu0 0.0
  %883 = vmatpush1.msra.mxu0 0.0
  %884 = vmatprep.subr.mxu0 0.0
  %885 = vmatpush1.msra.mxu0 0.0
  %886 = vmatprep.subr.mxu0 0.0
  %887 = vmatpush1.msra.mxu0 0.0
  %888 = vmatprep.subr.mxu0 0.0
  %889 = vmatpush1.msra.mxu0 0.0
  %890 = vmatprep.subr.mxu0 0.0
  %891 = vmatpush1.msra.mxu0 0.0
  %892 = vmatprep.subr.mxu0 0.0
  %893 = vmatpush1.msra.mxu0 0.0
  %894 = vmatprep.subr.mxu0 0.0
  %895 = vmatpush1.msra.mxu0 0.0
  %896 = vmatprep.subr.mxu0 0.0
  %897 = vmatpush1.msra.mxu0 0.0
  %898 = vmatprep.subr.mxu0 0.0
  %899 = vmatpush1.msra.mxu0 0.0
  %900 = vmatprep.subr.mxu0 0.0
  %901 = vmatpush1.msra.mxu0 0.0
  %902 = vmatprep.subr.mxu0 0.0
  %903 = vmatpush1.msra.mxu0 0.0
  %904 = vmatprep.subr.mxu0 0.0
  %905 = vmatpush1.msra.mxu0 0.0
  %906 = vmatprep.subr.mxu0 0.0
  %907 = vmatpush1.msra.mxu0 0.0
  %908 = vmatprep.subr.mxu0 0.0
  %909 = vmatpush1.msra.mxu0 0.0
  %910 = vmatprep.subr.mxu0 0.0
  %911 = vmatpush1.msra.mxu0 0.0
  %912 = vmatprep.subr.mxu0 0.0
  %913 = vmatpush1.msra.mxu0 0.0
  %914 = vmatprep.subr.mxu0 0.0
  %915 = vmatpush1.msra.mxu0 0.0
  %916 = vmatprep.subr.mxu0 0.0
  %917 = vmatpush1.msra.mxu0 0.0
  %918 = vmatprep.subr.mxu0 0.0
  %919 = vmatpush1.msra.mxu0 0.0
  %920 = vmatprep.subr.mxu0 0.0
  %921 = vmatpush1.msra.mxu0 0.0
  %922 = vmatprep.subr.mxu0 0.0
  %923 = vmatpush1.msra.mxu0 0.0
  %924 = vmatprep.subr.mxu0 0.0
  %925 = vmatpush1.msra.mxu0 0.0
  %926 = vmatprep.subr.mxu0 0.0
  %927 = vmatpush1.msra.mxu0 0.0
  %928 = vmatprep.subr.mxu0 0.0
  %929 = vmatpush1.msra.mxu0 0.0
  %930 = vmatprep.mubr.f32.mxu0 0.0
  %931 = vmatmul.mubr.f32.gmra.mrb[0].mxu0 %v864
  %v932 = vpop.f32.mrb[0].mxu0
  %v933 = vadd.f32 0.0, %v932
  %v934 = vpop.f32.mrb[0].mxu0
  %935 = vdwg.mxu0
  %v936 = vadd.f32 %v169, %v933
  %v937 = vmul.f32 %v936, %v181
  %v938 = vtanh.pop %v937
  %v939 = vmul.f32 %v938, %v181
  %v940 = vadd.f32 %v939, %v182
  %v941 = vmul.f32 %v940, %v854
  %943 = vrot.lane.b32.xlu0 %v940, 64
  %v944 = vpop.permute.xlu0 %943
  %v946 = vmul.f32 %v940, %v944
  %948 = vrot.lane.b32.xlu0 %v946, 32
  %v949 = vpop.permute.xlu0 %948
  %v951 = vadd.f32 %v941, %v949
  %v952 = vtanh.pop %v951
  %954 = vrot.lane.b32.xlu0 %v952, 64
  %v955 = vpop.permute.xlu0 %954
  %v957 = vmul.f32 %v940, %v955
  %v958 = vld [vmem:[%s4] sm:$0x1]
  %v960 = vlaneseq
  %v961 = vshrl.u32 %v960, 7
  %v962 = vsub.s32 0, %v961
  %v963 = vrot.slane %v958, %v962
  %964 = vrot.lane.b32.xlu0 %v963, 96
  %v965 = vpop.permute.xlu0 %964
  %v967 = vmul.f32 %v957, %v965
  %969 = vrot.lane.b32.xlu0 %v967, 32
  %v970 = vpop.permute.xlu0 %969
  %v972 = vsel %vm183, %v970, 0.0
  %973 = vadd.xlane.f32.xlu0 %v972
  %v974 = vpop.xlane.xlu0 %973
  %v975 = vld [vmem:[#allocation2] sm:$0x1]
  %v977 = vlaneseq
  %v978 = vshrl.u32 %v977, 7
  %v979 = vsub.s32 0, %v978
  %v980 = vrot.slane %v975, %v979
  %v982 = vadd.f32 %v974, %v980
  %v983 = vxor.u32 %v982, 2147483648
  %v984 = vmul.f32 %v983, 1.442695
  %v985 = vpow.pop %v984
  %v986 = vadd.f32 %v985, 1.0
  %v987 = vrcp.pop %v986
  %v988 = vmul.f32 1.0, %v987
  %vm989 = vcmask 7168
  %990 = vst.msk [vmem:[%s6] sm:$0xff] %vm989, %v988
  // Predicated region
  $region26: #{student_model_forward.1} parent=0 // pred_check
    _
  $region27: #{student_model_forward.1} parent=0 // pred_check_branch
    %992 = sbr.rel (0) target = $region29
  $region28: #{student_model_forward.1} parent=0 // pred_region
    _
  $region29: #{student_model_forward.1} parent=0 // pred_fallthru
    _
  // Predicated region
  $region30: #{student_model_forward.1} parent=0 // pred_check
    _
  $region31: #{student_model_forward.1} parent=0 // pred_check_branch
    %994 = sbr.rel (0) target = $region33
  $region32: #{student_model_forward.1} parent=0 // pred_region
    _
  $region33: #{student_model_forward.1} parent=0 // pred_fallthru
    _

</llo_original>
